<compile_context>
chip_gen: v7x
topology: tpu7x:2x2x1
jax: 0.10.0
libtpu: 0.0.40
codegen_flags: <defaults>
</compile_context>

<pallas_src>
import jax
import jax.numpy as jnp
from jax.experimental import pallas as pl
from jax.experimental.pallas import tpu as pltpu


_LANE = 128  # TPU vreg lane width


def _round_up(n, m):
    return ((n + m - 1) // m) * m


def _fused_mlp_kernel(x_ref, w1_ref, b1_ref, w2_ref, b2_ref, o_ref):
    """y = relu(x @ w1 + b1) @ w2 + b2, everything resident in VMEM."""
    # Layer 1: single MXU pass + fused bias/ReLU epilogue on the VPU.
    h = jnp.dot(x_ref[...], w1_ref[...], preferred_element_type=jnp.float32)
    h = jnp.maximum(h + b1_ref[...], 0.0)
    # Layer 2: single MXU pass + fused bias add; lane-dense store.
    y = jnp.dot(h, w2_ref[...], preferred_element_type=jnp.float32)
    o_ref[...] = (y + b2_ref[...]).astype(o_ref.dtype)


def fused_mlp_pallas(x, w1, b1, w2, b2):
    """relu(x @ w1 + b1) @ w2 + b2 in a single pallas_call.

    x: (B, K) f32, w1: (K, H) f32, b1: (H,) f32, w2: (H, N) f32, b2: (N,) f32
    -> (B, N) f32
    """
    B, K = x.shape
    Kw, H = w1.shape
    Hw, N = w2.shape
    assert K == Kw and H == Hw and b1.shape == (H,) and b2.shape == (N,)

    # Pad hidden/output widths to the lane width so stores are unmasked.
    Hp = _round_up(H, _LANE)
    Np = _round_up(N, _LANE)

    w1p = jnp.pad(w1, ((0, 0), (0, Hp - H)))
    b1p = jnp.pad(b1, (0, Hp - H)).reshape(1, Hp)
    w2p = jnp.pad(w2, ((0, Hp - H), (0, Np - N)))
    b2p = jnp.pad(b2, (0, Np - N)).reshape(1, Np)

    out_padded = pl.pallas_call(
        _fused_mlp_kernel,
        out_shape=jax.ShapeDtypeStruct((B, Np), x.dtype),
        grid=(1,),  # single step: whole problem resident in VMEM
        in_specs=[
            pl.BlockSpec((B, K), lambda i: (0, 0)),    # x  (full, 8 KB)
            pl.BlockSpec((K, Hp), lambda i: (0, 0)),   # w1 padded (512 KB)
            pl.BlockSpec((1, Hp), lambda i: (0, 0)),   # b1 padded
            pl.BlockSpec((Hp, Np), lambda i: (0, 0)),  # w2 padded (64 KB)
            pl.BlockSpec((1, Np), lambda i: (0, 0)),   # b2 padded
        ],
        out_specs=pl.BlockSpec((B, Np), lambda i: (0, 0)),
        compiler_params=pltpu.CompilerParams(
            dimension_semantics=("arbitrary",),
        ),
    )(x, w1p, b1p, w2p, b2p)

    # Slice back to the true output width (layout plumbing, not compute).
    return out_padded[:, :N]


def init_linear_params(key, in_features, out_features):
    """Deterministic init mimicking torch.nn.Linear (U[-1/sqrt(fan_in), +])."""
    kw, kb = jax.random.split(key)
    bound = 1.0 / jnp.sqrt(jnp.float32(in_features))
    # Stored as (K, N) == torch weight (N, K) transposed, so y = x @ w + b.
    w = jax.random.uniform(
        kw, (in_features, out_features), jnp.float32, -bound, bound
    )
    b = jax.random.uniform(kb, (out_features,), jnp.float32, -bound, bound)
    return w, b


def dynamic_nn_forward(x_nchw, params):
    """Equivalent of DynamicNN.forward: flatten to (B, -1), then the layers."""
    B = x_nchw.shape[0]
    x = x_nchw.reshape(B, -1)  # torch .view(B, -1), row-major
    (w1, b1), (w2, b2) = params
    return fused_mlp_pallas(x, w1, b1, w2, b2)


if __name__ == "__main__":
    key = jax.random.PRNGKey(0)
    k_in, k_l1, k_l2 = jax.random.split(key, 3)

    # Small shapes consistent with the flatten-then-MLP forward pass.
    B, C, H, W = 2, 4, 16, 16
    in_features = C * H * W          # 1024
    hidden, out_features = 32, 16

    x = jax.random.normal(k_in, (B, C, H, W), jnp.float32)
    params = (
        init_linear_params(k_l1, in_features, hidden),
        init_linear_params(k_l2, hidden, out_features),
    )

    y = dynamic_nn_forward(x, params)
    jax.block_until_ready(y)

    # Pure-JAX reference for a sanity check.
    xf = x.reshape(B, -1)
    (w1, b1), (w2, b2) = params
    ref = jnp.maximum(xf @ w1 + b1, 0.0) @ w2 + b2
    assert y.shape == (B, out_features)
    assert jnp.allclose(y, ref, atol=1e-5, rtol=1e-5)

    print("KERNEL_OK")
</pallas_src>

<mosaic_0001>
module attributes {stable_mosaic.version = 11 : i64} {
  func.func @_fused_mlp_kernel(%arg0: i32, %arg1: memref<2x1024xf32, #tpu.memory_space<vmem>>, %arg2: memref<1024x128xf32, #tpu.memory_space<vmem>>, %arg3: memref<1x128xf32, #tpu.memory_space<vmem>>, %arg4: memref<128x128xf32, #tpu.memory_space<vmem>>, %arg5: memref<1x128xf32, #tpu.memory_space<vmem>>, %arg6: memref<2x128xf32, #tpu.memory_space<vmem>>) attributes {dimension_semantics = [#tpu.dimension_semantics<arbitrary>], iteration_bounds = array<i64: 1>, scalar_prefetch = 0 : i64, scratch_operands = 0 : i64, tpu.core_type = #tpu.core_type<tc>, window_params = [{pipeline_mode = #tpu.pipeline_mode<synchronous>, transform_indices = @transform_0, window_bounds = array<i64: 2, 1024>}, {pipeline_mode = #tpu.pipeline_mode<synchronous>, transform_indices = @transform_1, window_bounds = array<i64: 1024, 128>}, {pipeline_mode = #tpu.pipeline_mode<synchronous>, transform_indices = @transform_2, window_bounds = array<i64: 1, 128>}, {pipeline_mode = #tpu.pipeline_mode<synchronous>, transform_indices = @transform_3, window_bounds = array<i64: 128, 128>}, {pipeline_mode = #tpu.pipeline_mode<synchronous>, transform_indices = @transform_4, window_bounds = array<i64: 1, 128>}, {pipeline_mode = #tpu.pipeline_mode<synchronous>, transform_indices = @transform_5, window_bounds = array<i64: 2, 128>}]} {
    %c0 = arith.constant 0 : index
    %c0_0 = arith.constant 0 : index
    %0 = vector.load %arg1[%c0, %c0_0] : memref<2x1024xf32, #tpu.memory_space<vmem>>, vector<2x1024xf32>
    %c0_1 = arith.constant 0 : index
    %c0_2 = arith.constant 0 : index
    %1 = vector.load %arg2[%c0_1, %c0_2] : memref<1024x128xf32, #tpu.memory_space<vmem>>, vector<1024x128xf32>
    %cst = arith.constant dense<0.000000e+00> : vector<2x128xf32>
    %2 = tpu.matmul %0, %1, %cst {dimension_numbers = #tpu.dot_dimension_numbers<[1], [0], [0], [1], [0, 0, 1, 1], [], []>} : vector<2x1024xf32>, vector<1024x128xf32>, vector<2x128xf32> -> vector<2x128xf32>
    %c0_3 = arith.constant 0 : index
    %c0_4 = arith.constant 0 : index
    %3 = vector.load %arg3[%c0_3, %c0_4] : memref<1x128xf32, #tpu.memory_space<vmem>>, vector<1x128xf32>
    %4 = vector.broadcast %3 : vector<1x128xf32> to vector<2x128xf32>
    %5 = arith.addf %2, %4 : vector<2x128xf32>
    %cst_5 = arith.constant 0.000000e+00 : f32
    %6 = vector.broadcast %cst_5 : f32 to vector<2x128xf32>
    %7 = arith.maximumf %5, %6 : vector<2x128xf32>
    %c0_6 = arith.constant 0 : index
    %c0_7 = arith.constant 0 : index
    %8 = vector.load %arg4[%c0_6, %c0_7] : memref<128x128xf32, #tpu.memory_space<vmem>>, vector<128x128xf32>
    %cst_8 = arith.constant dense<0.000000e+00> : vector<2x128xf32>
    %9 = tpu.matmul %7, %8, %cst_8 {dimension_numbers = #tpu.dot_dimension_numbers<[1], [0], [0], [1], [0, 0, 1, 1], [], []>} : vector<2x128xf32>, vector<128x128xf32>, vector<2x128xf32> -> vector<2x128xf32>
    %c0_9 = arith.constant 0 : index
    %c0_10 = arith.constant 0 : index
    %10 = vector.load %arg5[%c0_9, %c0_10] : memref<1x128xf32, #tpu.memory_space<vmem>>, vector<1x128xf32>
    %11 = vector.broadcast %10 : vector<1x128xf32> to vector<2x128xf32>
    %12 = arith.addf %9, %11 : vector<2x128xf32>
    %c0_11 = arith.constant 0 : index
    %c0_12 = arith.constant 0 : index
    %13 = vector.load %arg6[%c0_11, %c0_12] : memref<2x128xf32, #tpu.memory_space<vmem>>, vector<2x128xf32>
    tpu.vector_store %arg6[%c0_11, %c0_12], %12 {strides = array<i32>} : memref<2x128xf32, #tpu.memory_space<vmem>>, vector<2x128xf32>,
    return
  }
  func.func @transform_0(%arg0: i32) -> (i32, i32) {
    %c0_i32 = arith.constant 0 : i32
    %c0_i32_0 = arith.constant 0 : i32
    %c0_i32_1 = arith.constant 0 : i32
    return %c0_i32, %c0_i32_0 : i32, i32
  }
  func.func @transform_1(%arg0: i32) -> (i32, i32) {
    %c0_i32 = arith.constant 0 : i32
    %c0_i32_0 = arith.constant 0 : i32
    %c0_i32_1 = arith.constant 0 : i32
    return %c0_i32, %c0_i32_0 : i32, i32
  }
  func.func @transform_2(%arg0: i32) -> (i32, i32) {
    %c0_i32 = arith.constant 0 : i32
    %c0_i32_0 = arith.constant 0 : i32
    %c0_i32_1 = arith.constant 0 : i32
    return %c0_i32, %c0_i32_0 : i32, i32
  }
  func.func @transform_3(%arg0: i32) -> (i32, i32) {
    %c0_i32 = arith.constant 0 : i32
    %c0_i32_0 = arith.constant 0 : i32
    %c0_i32_1 = arith.constant 0 : i32
    return %c0_i32, %c0_i32_0 : i32, i32
  }
  func.func @transform_4(%arg0: i32) -> (i32, i32) {
    %c0_i32 = arith.constant 0 : i32
    %c0_i32_0 = arith.constant 0 : i32
    %c0_i32_1 = arith.constant 0 : i32
    return %c0_i32, %c0_i32_0 : i32, i32
  }
  func.func @transform_5(%arg0: i32) -> (i32, i32) {
    %c0_i32 = arith.constant 0 : i32
    %c0_i32_0 = arith.constant 0 : i32
    %c0_i32_1 = arith.constant 0 : i32
    return %c0_i32, %c0_i32_0 : i32, i32
  }
}

</mosaic_0001>

<llo_original>
// kernel: tpu_custom_call.1
$region0: #{tpu_custom_call.1}
  #allocation0 [shape = 'u32[]', space=smem, size = 0x4, offset = 0x4, fixed_abs, tag = 'smem constant byte address 0x4 - core index']
  #allocation1 [shape = 'u32[144,128]{1,0:T(1,128)}', space=vmem, size = 0x12000, scoped, tag = 'internal scratch']
  %s0 = inlined_call_operand.hbm [shape: f32[2,1024], index: 0, kind: input, shape index: {}]
  %s1 = inlined_call_operand.hbm [shape: f32[1024,128], index: 1, kind: input, shape index: {}]
  %s2 = inlined_call_operand.vmem [shape: f32[1,128], index: 2, kind: input, shape index: {}]
  %s3 = inlined_call_operand.hbm [shape: f32[128,128], index: 3, kind: input, shape index: {}]
  %s4 = inlined_call_operand.vmem [shape: f32[1,128], index: 4, kind: input, shape index: {}]
  %s5 = inlined_call_operand.hbm [shape: f32[2,128], index: 5, kind: output, shape index: {}]
  %s6 = sld [smem:[#allocation0]]
  $region42: #{tpu_custom_call.1} parent=0
    _
  %s8 = ssub.s32 1, %s6
  %s9 = scalar_select 0, %s8, %s6
  $region1: #{tpu_custom_call.1} parent=0
    #allocation2 [shape = 'u8[8192]{0}', space=vmem, size = 0x2000, scoped, tag = 'input window, operand 0, single buffered']
    #allocation3 [shape = 's32[1]{0}', space=sflag, size = 0x4, scoped, tag = 'scoped memory for tpu_custom_call.1']
    #allocation4 [shape = 's32[1]{0}', space=sflag, size = 0x4, scoped, tag = 'scoped memory for tpu_custom_call.1']
    #allocation5 [shape = 'u8[524288]{0}', space=vmem, size = 0x80000, scoped, tag = 'input window, operand 1, single buffered']
    #allocation6 [shape = 's32[1]{0}', space=sflag, size = 0x4, scoped, tag = 'scoped memory for tpu_custom_call.1']
    #allocation7 [shape = 'u8[65536]{0}', space=vmem, size = 0x10000, scoped, tag = 'input window, operand 3, single buffered']
    #allocation8 [shape = 'u8[1024]{0}', space=vmem, size = 0x400, scoped, tag = 'output window, operand 0, single buffered']
    %10 = vsyncpa [#allocation3], 0
    %11 = vsyncpa [#allocation6], 0
    %12 = vsyncpa [#allocation4], 0
    // Predicated region
    $region2: #{tpu_custom_call.1} parent=1 // pred_check
      _
    $region3: #{tpu_custom_call.1} parent=1 // pred_check_branch
      %14 = sbr.rel (0) target = $region5
    $region4: #{tpu_custom_call.1} parent=1 // pred_region
      %s16 = ssub.s32 256, 256
      %17 = vsyncadd [#allocation3], %s16
      %s19 = sshll.u32 [#allocation2], 4
      %s20 = int_to_ptr.vmem [resolvable:$true] %s19
      %22 = dma.hbm_to_vmem [thread:$0]  %s0, 256, %s20, [#allocation3]
    $region5: #{tpu_custom_call.1} parent=1 // pred_fallthru
      _
    // Predicated region
    $region6: #{tpu_custom_call.1} parent=1 // pred_check
      _
    $region7: #{tpu_custom_call.1} parent=1 // pred_check_branch
      %24 = sbr.rel (0) target = $region9
    $region8: #{tpu_custom_call.1} parent=1 // pred_region
      %s26 = ssub.s32 16384, 16384
      %27 = vsyncadd [#allocation6], %s26
      %s28 = sshll.u32 [#allocation5], 4
      %s29 = int_to_ptr.vmem [resolvable:$true] %s28
      %34 = dma.hbm_to_vmem [thread:$0]  %s1, 16384, %s29, [#allocation6], 128, 128, 8
    $region9: #{tpu_custom_call.1} parent=1 // pred_fallthru
      _
    // Predicated region
    $region10: #{tpu_custom_call.1} parent=1 // pred_check
      _
    $region11: #{tpu_custom_call.1} parent=1 // pred_check_branch
      %36 = sbr.rel (0) target = $region13
    $region12: #{tpu_custom_call.1} parent=1 // pred_region
      _
    $region13: #{tpu_custom_call.1} parent=1 // pred_fallthru
      _
    // Predicated region
    $region14: #{tpu_custom_call.1} parent=1 // pred_check
      _
    $region15: #{tpu_custom_call.1} parent=1 // pred_check_branch
      %38 = sbr.rel (0) target = $region17
    $region16: #{tpu_custom_call.1} parent=1 // pred_region
      %s40 = ssub.s32 2048, 2048
      %41 = vsyncadd [#allocation6], %s40
      %s42 = sshll.u32 [#allocation7], 4
      %s43 = int_to_ptr.vmem [resolvable:$true] %s42
      %48 = dma.hbm_to_vmem [thread:$0]  %s3, 2048, %s43, [#allocation6], 128, 128, 8
    $region17: #{tpu_custom_call.1} parent=1 // pred_fallthru
      _
    // Predicated region
    $region18: #{tpu_custom_call.1} parent=1 // pred_check
      _
    $region19: #{tpu_custom_call.1} parent=1 // pred_check_branch
      %50 = sbr.rel (0) target = $region21
    $region20: #{tpu_custom_call.1} parent=1 // pred_region
      _
    $region21: #{tpu_custom_call.1} parent=1 // pred_fallthru
      _
    // Predicated region
    $region22: #{tpu_custom_call.1} parent=1 // pred_check
      _
    $region23: #{tpu_custom_call.1} parent=1 // pred_check_branch
      %52 = sbr.rel (0) target = $region25
    $region24: #{tpu_custom_call.1} parent=1 // pred_region
      %53 = dma.done [#allocation3], 256
    $region25: #{tpu_custom_call.1} parent=1 // pred_fallthru
      _
    // Predicated region
    $region26: #{tpu_custom_call.1} parent=1 // pred_check
      _
    $region27: #{tpu_custom_call.1} parent=1 // pred_check_branch
      %55 = sbr.rel (0) target = $region29
    $region28: #{tpu_custom_call.1} parent=1 // pred_region
      %56 = dma.done [#allocation6], 16384
    $region29: #{tpu_custom_call.1} parent=1 // pred_fallthru
      _
    // Predicated region
    $region30: #{tpu_custom_call.1} parent=1 // pred_check
      _
    $region31: #{tpu_custom_call.1} parent=1 // pred_check_branch
      %58 = sbr.rel (0) target = $region33
    $region32: #{tpu_custom_call.1} parent=1 // pred_region
      %59 = dma.done [#allocation6], 2048
    $region33: #{tpu_custom_call.1} parent=1 // pred_fallthru
      _
    %v60 = vld [vmem:[#allocation2] sm:$0xff]
    %v61 = vld [vmem:[#allocation2 + $0x8] sm:$0xff]
    %v62 = vld [vmem:[#allocation5] sm:$0xff]
    %v63 = vld [vmem:[#allocation5 + $0x8] sm:$0xff]
    %v64 = vld [vmem:[#allocation5 + $0x10] sm:$0xff]
    %v65 = vld [vmem:[#allocation5 + $0x18] sm:$0xff]
    %v66 = vld [vmem:[#allocation5 + $0x20] sm:$0xff]
    %v67 = vld [vmem:[#allocation5 + $0x28] sm:$0xff]
    %v68 = vld [vmem:[#allocation5 + $0x30] sm:$0xff]
    %v69 = vld [vmem:[#allocation5 + $0x38] sm:$0xff]
    %v70 = vld [vmem:[#allocation5 + $0x40] sm:$0xff]
    %v71 = vld [vmem:[#allocation5 + $0x48] sm:$0xff]
    %v72 = vld [vmem:[#allocation5 + $0x50] sm:$0xff]
    %v73 = vld [vmem:[#allocation5 + $0x58] sm:$0xff]
    %v74 = vld [vmem:[#allocation5 + $0x60] sm:$0xff]
    %v75 = vld [vmem:[#allocation5 + $0x68] sm:$0xff]
    %v76 = vld [vmem:[#allocation5 + $0x70] sm:$0xff]
    %v77 = vld [vmem:[#allocation5 + $0x78] sm:$0xff]
    %v78 = vld [vmem:[#allocation5 + $0x80] sm:$0xff]
    %v79 = vld [vmem:[#allocation5 + $0x88] sm:$0xff]
    %v80 = vld [vmem:[#allocation5 + $0x90] sm:$0xff]
    %v81 = vld [vmem:[#allocation5 + $0x98] sm:$0xff]
    %v82 = vld [vmem:[#allocation5 + $0xa0] sm:$0xff]
    %v83 = vld [vmem:[#allocation5 + $0xa8] sm:$0xff]
    %v84 = vld [vmem:[#allocation5 + $0xb0] sm:$0xff]
    %v85 = vld [vmem:[#allocation5 + $0xb8] sm:$0xff]
    %v86 = vld [vmem:[#allocation5 + $0xc0] sm:$0xff]
    %v87 = vld [vmem:[#allocation5 + $0xc8] sm:$0xff]
    %v88 = vld [vmem:[#allocation5 + $0xd0] sm:$0xff]
    %v89 = vld [vmem:[#allocation5 + $0xd8] sm:$0xff]
    %v90 = vld [vmem:[#allocation5 + $0xe0] sm:$0xff]
    %v91 = vld [vmem:[#allocation5 + $0xe8] sm:$0xff]
    %v92 = vld [vmem:[#allocation5 + $0xf0] sm:$0xff]
    %v93 = vld [vmem:[#allocation5 + $0xf8] sm:$0xff]
    %v94 = vld [vmem:[#allocation5 + $0x100] sm:$0xff]
    %v95 = vld [vmem:[#allocation5 + $0x108] sm:$0xff]
    %v96 = vld [vmem:[#allocation5 + $0x110] sm:$0xff]
    %v97 = vld [vmem:[#allocation5 + $0x118] sm:$0xff]
    %v98 = vld [vmem:[#allocation5 + $0x120] sm:$0xff]
    %v99 = vld [vmem:[#allocation5 + $0x128] sm:$0xff]
    %v100 = vld [vmem:[#allocation5 + $0x130] sm:$0xff]
    %v101 = vld [vmem:[#allocation5 + $0x138] sm:$0xff]
    %v102 = vld [vmem:[#allocation5 + $0x140] sm:$0xff]
    %v103 = vld [vmem:[#allocation5 + $0x148] sm:$0xff]
    %v104 = vld [vmem:[#allocation5 + $0x150] sm:$0xff]
    %v105 = vld [vmem:[#allocation5 + $0x158] sm:$0xff]
    %v106 = vld [vmem:[#allocation5 + $0x160] sm:$0xff]
    %v107 = vld [vmem:[#allocation5 + $0x168] sm:$0xff]
    %v108 = vld [vmem:[#allocation5 + $0x170] sm:$0xff]
    %v109 = vld [vmem:[#allocation5 + $0x178] sm:$0xff]
    %v110 = vld [vmem:[#allocation5 + $0x180] sm:$0xff]
    %v111 = vld [vmem:[#allocation5 + $0x188] sm:$0xff]
    %v112 = vld [vmem:[#allocation5 + $0x190] sm:$0xff]
    %v113 = vld [vmem:[#allocation5 + $0x198] sm:$0xff]
    %v114 = vld [vmem:[#allocation5 + $0x1a0] sm:$0xff]
    %v115 = vld [vmem:[#allocation5 + $0x1a8] sm:$0xff]
    %v116 = vld [vmem:[#allocation5 + $0x1b0] sm:$0xff]
    %v117 = vld [vmem:[#allocation5 + $0x1b8] sm:$0xff]
    %v118 = vld [vmem:[#allocation5 + $0x1c0] sm:$0xff]
    %v119 = vld [vmem:[#allocation5 + $0x1c8] sm:$0xff]
    %v120 = vld [vmem:[#allocation5 + $0x1d0] sm:$0xff]
    %v121 = vld [vmem:[#allocation5 + $0x1d8] sm:$0xff]
    %v122 = vld [vmem:[#allocation5 + $0x1e0] sm:$0xff]
    %v123 = vld [vmem:[#allocation5 + $0x1e8] sm:$0xff]
    %v124 = vld [vmem:[#allocation5 + $0x1f0] sm:$0xff]
    %v125 = vld [vmem:[#allocation5 + $0x1f8] sm:$0xff]
    %v126 = vld [vmem:[#allocation5 + $0x200] sm:$0xff]
    %v127 = vld [vmem:[#allocation5 + $0x208] sm:$0xff]
    %v128 = vld [vmem:[#allocation5 + $0x210] sm:$0xff]
    %v129 = vld [vmem:[#allocation5 + $0x218] sm:$0xff]
    %v130 = vld [vmem:[#allocation5 + $0x220] sm:$0xff]
    %v131 = vld [vmem:[#allocation5 + $0x228] sm:$0xff]
    %v132 = vld [vmem:[#allocation5 + $0x230] sm:$0xff]
    %v133 = vld [vmem:[#allocation5 + $0x238] sm:$0xff]
    %v134 = vld [vmem:[#allocation5 + $0x240] sm:$0xff]
    %v135 = vld [vmem:[#allocation5 + $0x248] sm:$0xff]
    %v136 = vld [vmem:[#allocation5 + $0x250] sm:$0xff]
    %v137 = vld [vmem:[#allocation5 + $0x258] sm:$0xff]
    %v138 = vld [vmem:[#allocation5 + $0x260] sm:$0xff]
    %v139 = vld [vmem:[#allocation5 + $0x268] sm:$0xff]
    %v140 = vld [vmem:[#allocation5 + $0x270] sm:$0xff]
    %v141 = vld [vmem:[#allocation5 + $0x278] sm:$0xff]
    %v142 = vld [vmem:[#allocation5 + $0x280] sm:$0xff]
    %v143 = vld [vmem:[#allocation5 + $0x288] sm:$0xff]
    %v144 = vld [vmem:[#allocation5 + $0x290] sm:$0xff]
    %v145 = vld [vmem:[#allocation5 + $0x298] sm:$0xff]
    %v146 = vld [vmem:[#allocation5 + $0x2a0] sm:$0xff]
    %v147 = vld [vmem:[#allocation5 + $0x2a8] sm:$0xff]
    %v148 = vld [vmem:[#allocation5 + $0x2b0] sm:$0xff]
    %v149 = vld [vmem:[#allocation5 + $0x2b8] sm:$0xff]
    %v150 = vld [vmem:[#allocation5 + $0x2c0] sm:$0xff]
    %v151 = vld [vmem:[#allocation5 + $0x2c8] sm:$0xff]
    %v152 = vld [vmem:[#allocation5 + $0x2d0] sm:$0xff]
    %v153 = vld [vmem:[#allocation5 + $0x2d8] sm:$0xff]
    %v154 = vld [vmem:[#allocation5 + $0x2e0] sm:$0xff]
    %v155 = vld [vmem:[#allocation5 + $0x2e8] sm:$0xff]
    %v156 = vld [vmem:[#allocation5 + $0x2f0] sm:$0xff]
    %v157 = vld [vmem:[#allocation5 + $0x2f8] sm:$0xff]
    %v158 = vld [vmem:[#allocation5 + $0x300] sm:$0xff]
    %v159 = vld [vmem:[#allocation5 + $0x308] sm:$0xff]
    %v160 = vld [vmem:[#allocation5 + $0x310] sm:$0xff]
    %v161 = vld [vmem:[#allocation5 + $0x318] sm:$0xff]
    %v162 = vld [vmem:[#allocation5 + $0x320] sm:$0xff]
    %v163 = vld [vmem:[#allocation5 + $0x328] sm:$0xff]
    %v164 = vld [vmem:[#allocation5 + $0x330] sm:$0xff]
    %v165 = vld [vmem:[#allocation5 + $0x338] sm:$0xff]
    %v166 = vld [vmem:[#allocation5 + $0x340] sm:$0xff]
    %v167 = vld [vmem:[#allocation5 + $0x348] sm:$0xff]
    %v168 = vld [vmem:[#allocation5 + $0x350] sm:$0xff]
    %v169 = vld [vmem:[#allocation5 + $0x358] sm:$0xff]
    %v170 = vld [vmem:[#allocation5 + $0x360] sm:$0xff]
    %v171 = vld [vmem:[#allocation5 + $0x368] sm:$0xff]
    %v172 = vld [vmem:[#allocation5 + $0x370] sm:$0xff]
    %v173 = vld [vmem:[#allocation5 + $0x378] sm:$0xff]
    %v174 = vld [vmem:[#allocation5 + $0x380] sm:$0xff]
    %v175 = vld [vmem:[#allocation5 + $0x388] sm:$0xff]
    %v176 = vld [vmem:[#allocation5 + $0x390] sm:$0xff]
    %v177 = vld [vmem:[#allocation5 + $0x398] sm:$0xff]
    %v178 = vld [vmem:[#allocation5 + $0x3a0] sm:$0xff]
    %v179 = vld [vmem:[#allocation5 + $0x3a8] sm:$0xff]
    %v180 = vld [vmem:[#allocation5 + $0x3b0] sm:$0xff]
    %v181 = vld [vmem:[#allocation5 + $0x3b8] sm:$0xff]
    %v182 = vld [vmem:[#allocation5 + $0x3c0] sm:$0xff]
    %v183 = vld [vmem:[#allocation5 + $0x3c8] sm:$0xff]
    %v184 = vld [vmem:[#allocation5 + $0x3d0] sm:$0xff]
    %v185 = vld [vmem:[#allocation5 + $0x3d8] sm:$0xff]
    %v186 = vld [vmem:[#allocation5 + $0x3e0] sm:$0xff]
    %v187 = vld [vmem:[#allocation5 + $0x3e8] sm:$0xff]
    %v188 = vld [vmem:[#allocation5 + $0x3f0] sm:$0xff]
    %v189 = vld [vmem:[#allocation5 + $0x3f8] sm:$0xff]
    %v190 = vld [vmem:[%s2] sm:$0x1]
    %v192 = vlaneseq
    %v193 = vshrl.u32 %v192, 7
    %v194 = vsub.s32 0, %v193
    %v195 = vrot.slane %v190, %v194
    %v199 = vcombine.high %v60, %v60
    %v201 = vunpack.c.l.s4 1983009808
    %v202 = vunpack.c.0.s8 %v201
    %v203 = vlaneseq
    %v204 = vshrl.u32 %v203, 7
    %v205 = vsub.s32 %v202, %v204
    %v206 = vrot.slane %v60, %v205
    %v208 = vunpack.c.l.s4 1983009808
    %v209 = vunpack.c.0.s8 %v208
    %v210 = vlaneseq
    %v211 = vshrl.u32 %v210, 7
    %v212 = vsub.s32 %v209, %v211
    %v213 = vrot.slane %v199, %v212
    %v214 = vcombine.high %v206, %v206
    %v215 = vcombine.high %v213, %v213
    %v216 = vcombine.high %v61, %v61
    %v218 = vunpack.c.l.s4 1983009808
    %v219 = vunpack.c.0.s8 %v218
    %v220 = vlaneseq
    %v221 = vshrl.u32 %v220, 7
    %v222 = vsub.s32 %v219, %v221
    %v223 = vrot.slane %v61, %v222
    %v225 = vunpack.c.l.s4 1983009808
    %v226 = vunpack.c.0.s8 %v225
    %v227 = vlaneseq
    %v228 = vshrl.u32 %v227, 7
    %v229 = vsub.s32 %v226, %v228
    %v230 = vrot.slane %v216, %v229
    %v231 = vcombine.high %v223, %v223
    %v232 = vcombine.high %v230, %v230
    %241 = vmatprep.subr.mxu0 0.0
    %242 = vmatpush1.msra.mxu0 %v62
    %243 = vmatprep.subr.mxu0 0.0
    %244 = vmatpush1.msra.mxu0 %v63
    %245 = vmatprep.subr.mxu0 0.0
    %246 = vmatpush1.msra.mxu0 %v64
    %247 = vmatprep.subr.mxu0 0.0
    %248 = vmatpush1.msra.mxu0 %v65
    %249 = vmatprep.subr.mxu0 0.0
    %250 = vmatpush1.msra.mxu0 %v66
    %251 = vmatprep.subr.mxu0 0.0
    %252 = vmatpush1.msra.mxu0 %v67
    %253 = vmatprep.subr.mxu0 0.0
    %254 = vmatpush1.msra.mxu0 %v68
    %255 = vmatprep.subr.mxu0 0.0
    %256 = vmatpush1.msra.mxu0 %v69
    %257 = vmatprep.subr.mxu0 0.0
    %258 = vmatpush1.msra.mxu0 %v70
    %259 = vmatprep.subr.mxu0 0.0
    %260 = vmatpush1.msra.mxu0 %v71
    %261 = vmatprep.subr.mxu0 0.0
    %262 = vmatpush1.msra.mxu0 %v72
    %263 = vmatprep.subr.mxu0 0.0
    %264 = vmatpush1.msra.mxu0 %v73
    %265 = vmatprep.subr.mxu0 0.0
    %266 = vmatpush1.msra.mxu0 %v74
    %267 = vmatprep.subr.mxu0 0.0
    %268 = vmatpush1.msra.mxu0 %v75
    %269 = vmatprep.subr.mxu0 0.0
    %270 = vmatpush1.msra.mxu0 %v76
    %271 = vmatprep.subr.mxu0 0.0
    %272 = vmatpush1.msra.mxu0 %v77
    %273 = vmatprep.subr.mxu0 0.0
    %274 = vmatpush1.msra.mxu0 %v78
    %275 = vmatprep.subr.mxu0 0.0
    %276 = vmatpush1.msra.mxu0 %v79
    %277 = vmatprep.subr.mxu0 0.0
    %278 = vmatpush1.msra.mxu0 %v80
    %279 = vmatprep.subr.mxu0 0.0
    %280 = vmatpush1.msra.mxu0 %v81
    %281 = vmatprep.subr.mxu0 0.0
    %282 = vmatpush1.msra.mxu0 %v82
    %283 = vmatprep.subr.mxu0 0.0
    %284 = vmatpush1.msra.mxu0 %v83
    %285 = vmatprep.subr.mxu0 0.0
    %286 = vmatpush1.msra.mxu0 %v84
    %287 = vmatprep.subr.mxu0 0.0
    %288 = vmatpush1.msra.mxu0 %v85
    %289 = vmatprep.subr.mxu0 0.0
    %290 = vmatpush1.msra.mxu0 %v86
    %291 = vmatprep.subr.mxu0 0.0
    %292 = vmatpush1.msra.mxu0 %v87
    %293 = vmatprep.subr.mxu0 0.0
    %294 = vmatpush1.msra.mxu0 %v88
    %295 = vmatprep.subr.mxu0 0.0
    %296 = vmatpush1.msra.mxu0 %v89
    %297 = vmatprep.subr.mxu0 0.0
    %298 = vmatpush1.msra.mxu0 %v90
    %299 = vmatprep.subr.mxu0 0.0
    %300 = vmatpush1.msra.mxu0 %v91
    %301 = vmatprep.subr.mxu0 0.0
    %302 = vmatpush1.msra.mxu0 %v92
    %303 = vmatprep.subr.mxu0 0.0
    %304 = vmatpush1.msra.mxu0 %v93
    %305 = vmatprep.mubr.f32.mxu0 %v214
    %306 = vmatmul.mubr.f32.gmra.mrb[0].mxu0 %v206
    %v307 = vpop.f32.mrb[0].mxu0
    %v308 = vadd.f32 %v195, %v307
    %v309 = vpop.f32.mrb[0].mxu0
    %310 = vdwg.mxu0
    %311 = vmatprep.subr.mxu0 0.0
    %312 = vmatpush1.msra.mxu0 %v94
    %313 = vmatprep.subr.mxu0 0.0
    %314 = vmatpush1.msra.mxu0 %v95
    %315 = vmatprep.subr.mxu0 0.0
    %316 = vmatpush1.msra.mxu0 %v96
    %317 = vmatprep.subr.mxu0 0.0
    %318 = vmatpush1.msra.mxu0 %v97
    %319 = vmatprep.subr.mxu0 0.0
    %320 = vmatpush1.msra.mxu0 %v98
    %321 = vmatprep.subr.mxu0 0.0
    %322 = vmatpush1.msra.mxu0 %v99
    %323 = vmatprep.subr.mxu0 0.0
    %324 = vmatpush1.msra.mxu0 %v100
    %325 = vmatprep.subr.mxu0 0.0
    %326 = vmatpush1.msra.mxu0 %v101
    %327 = vmatprep.subr.mxu0 0.0
    %328 = vmatpush1.msra.mxu0 %v102
    %329 = vmatprep.subr.mxu0 0.0
    %330 = vmatpush1.msra.mxu0 %v103
    %331 = vmatprep.subr.mxu0 0.0
    %332 = vmatpush1.msra.mxu0 %v104
    %333 = vmatprep.subr.mxu0 0.0
    %334 = vmatpush1.msra.mxu0 %v105
    %335 = vmatprep.subr.mxu0 0.0
    %336 = vmatpush1.msra.mxu0 %v106
    %337 = vmatprep.subr.mxu0 0.0
    %338 = vmatpush1.msra.mxu0 %v107
    %339 = vmatprep.subr.mxu0 0.0
    %340 = vmatpush1.msra.mxu0 %v108
    %341 = vmatprep.subr.mxu0 0.0
    %342 = vmatpush1.msra.mxu0 %v109
    %343 = vmatprep.subr.mxu0 0.0
    %344 = vmatpush1.msra.mxu0 %v110
    %345 = vmatprep.subr.mxu0 0.0
    %346 = vmatpush1.msra.mxu0 %v111
    %347 = vmatprep.subr.mxu0 0.0
    %348 = vmatpush1.msra.mxu0 %v112
    %349 = vmatprep.subr.mxu0 0.0
    %350 = vmatpush1.msra.mxu0 %v113
    %351 = vmatprep.subr.mxu0 0.0
    %352 = vmatpush1.msra.mxu0 %v114
    %353 = vmatprep.subr.mxu0 0.0
    %354 = vmatpush1.msra.mxu0 %v115
    %355 = vmatprep.subr.mxu0 0.0
    %356 = vmatpush1.msra.mxu0 %v116
    %357 = vmatprep.subr.mxu0 0.0
    %358 = vmatpush1.msra.mxu0 %v117
    %359 = vmatprep.subr.mxu0 0.0
    %360 = vmatpush1.msra.mxu0 %v118
    %361 = vmatprep.subr.mxu0 0.0
    %362 = vmatpush1.msra.mxu0 %v119
    %363 = vmatprep.subr.mxu0 0.0
    %364 = vmatpush1.msra.mxu0 %v120
    %365 = vmatprep.subr.mxu0 0.0
    %366 = vmatpush1.msra.mxu0 %v121
    %367 = vmatprep.subr.mxu0 0.0
    %368 = vmatpush1.msra.mxu0 %v122
    %369 = vmatprep.subr.mxu0 0.0
    %370 = vmatpush1.msra.mxu0 %v123
    %371 = vmatprep.subr.mxu0 0.0
    %372 = vmatpush1.msra.mxu0 %v124
    %373 = vmatprep.subr.mxu0 0.0
    %374 = vmatpush1.msra.mxu0 %v125
    %375 = vmatprep.mubr.f32.mxu0 %v215
    %376 = vmatmul.mubr.f32.gmra.mrb[0].mxu0 %v213
    %v377 = vpop.f32.mrb[0].mxu0
    %v378 = vadd.f32 %v308, %v377
    %v379 = vpop.f32.mrb[0].mxu0
    %380 = vdwg.mxu0
    %381 = vmatprep.subr.mxu0 0.0
    %382 = vmatpush1.msra.mxu0 %v126
    %383 = vmatprep.subr.mxu0 0.0
    %384 = vmatpush1.msra.mxu0 %v127
    %385 = vmatprep.subr.mxu0 0.0
    %386 = vmatpush1.msra.mxu0 %v128
    %387 = vmatprep.subr.mxu0 0.0
    %388 = vmatpush1.msra.mxu0 %v129
    %389 = vmatprep.subr.mxu0 0.0
    %390 = vmatpush1.msra.mxu0 %v130
    %391 = vmatprep.subr.mxu0 0.0
    %392 = vmatpush1.msra.mxu0 %v131
    %393 = vmatprep.subr.mxu0 0.0
    %394 = vmatpush1.msra.mxu0 %v132
    %395 = vmatprep.subr.mxu0 0.0
    %396 = vmatpush1.msra.mxu0 %v133
    %397 = vmatprep.subr.mxu0 0.0
    %398 = vmatpush1.msra.mxu0 %v134
    %399 = vmatprep.subr.mxu0 0.0
    %400 = vmatpush1.msra.mxu0 %v135
    %401 = vmatprep.subr.mxu0 0.0
    %402 = vmatpush1.msra.mxu0 %v136
    %403 = vmatprep.subr.mxu0 0.0
    %404 = vmatpush1.msra.mxu0 %v137
    %405 = vmatprep.subr.mxu0 0.0
    %406 = vmatpush1.msra.mxu0 %v138
    %407 = vmatprep.subr.mxu0 0.0
    %408 = vmatpush1.msra.mxu0 %v139
    %409 = vmatprep.subr.mxu0 0.0
    %410 = vmatpush1.msra.mxu0 %v140
    %411 = vmatprep.subr.mxu0 0.0
    %412 = vmatpush1.msra.mxu0 %v141
    %413 = vmatprep.subr.mxu0 0.0
    %414 = vmatpush1.msra.mxu0 %v142
    %415 = vmatprep.subr.mxu0 0.0
    %416 = vmatpush1.msra.mxu0 %v143
    %417 = vmatprep.subr.mxu0 0.0
    %418 = vmatpush1.msra.mxu0 %v144
    %419 = vmatprep.subr.mxu0 0.0
    %420 = vmatpush1.msra.mxu0 %v145
    %421 = vmatprep.subr.mxu0 0.0
    %422 = vmatpush1.msra.mxu0 %v146
    %423 = vmatprep.subr.mxu0 0.0
    %424 = vmatpush1.msra.mxu0 %v147
    %425 = vmatprep.subr.mxu0 0.0
    %426 = vmatpush1.msra.mxu0 %v148
    %427 = vmatprep.subr.mxu0 0.0
    %428 = vmatpush1.msra.mxu0 %v149
    %429 = vmatprep.subr.mxu0 0.0
    %430 = vmatpush1.msra.mxu0 %v150
    %431 = vmatprep.subr.mxu0 0.0
    %432 = vmatpush1.msra.mxu0 %v151
    %433 = vmatprep.subr.mxu0 0.0
    %434 = vmatpush1.msra.mxu0 %v152
    %435 = vmatprep.subr.mxu0 0.0
    %436 = vmatpush1.msra.mxu0 %v153
    %437 = vmatprep.subr.mxu0 0.0
    %438 = vmatpush1.msra.mxu0 %v154
    %439 = vmatprep.subr.mxu0 0.0
    %440 = vmatpush1.msra.mxu0 %v155
    %441 = vmatprep.subr.mxu0 0.0
    %442 = vmatpush1.msra.mxu0 %v156
    %443 = vmatprep.subr.mxu0 0.0
    %444 = vmatpush1.msra.mxu0 %v157
    %445 = vmatprep.mubr.f32.mxu0 %v231
    %446 = vmatmul.mubr.f32.gmra.mrb[0].mxu0 %v223
    %v447 = vpop.f32.mrb[0].mxu0
    %v448 = vadd.f32 %v378, %v447
    %v449 = vpop.f32.mrb[0].mxu0
    %450 = vdwg.mxu0
    %451 = vmatprep.subr.mxu0 0.0
    %452 = vmatpush1.msra.mxu0 %v158
    %453 = vmatprep.subr.mxu0 0.0
    %454 = vmatpush1.msra.mxu0 %v159
    %455 = vmatprep.subr.mxu0 0.0
    %456 = vmatpush1.msra.mxu0 %v160
    %457 = vmatprep.subr.mxu0 0.0
    %458 = vmatpush1.msra.mxu0 %v161
    %459 = vmatprep.subr.mxu0 0.0
    %460 = vmatpush1.msra.mxu0 %v162
    %461 = vmatprep.subr.mxu0 0.0
    %462 = vmatpush1.msra.mxu0 %v163
    %463 = vmatprep.subr.mxu0 0.0
    %464 = vmatpush1.msra.mxu0 %v164
    %465 = vmatprep.subr.mxu0 0.0
    %466 = vmatpush1.msra.mxu0 %v165
    %467 = vmatprep.subr.mxu0 0.0
    %468 = vmatpush1.msra.mxu0 %v166
    %469 = vmatprep.subr.mxu0 0.0
    %470 = vmatpush1.msra.mxu0 %v167
    %471 = vmatprep.subr.mxu0 0.0
    %472 = vmatpush1.msra.mxu0 %v168
    %473 = vmatprep.subr.mxu0 0.0
    %474 = vmatpush1.msra.mxu0 %v169
    %475 = vmatprep.subr.mxu0 0.0
    %476 = vmatpush1.msra.mxu0 %v170
    %477 = vmatprep.subr.mxu0 0.0
    %478 = vmatpush1.msra.mxu0 %v171
    %479 = vmatprep.subr.mxu0 0.0
    %480 = vmatpush1.msra.mxu0 %v172
    %481 = vmatprep.subr.mxu0 0.0
    %482 = vmatpush1.msra.mxu0 %v173
    %483 = vmatprep.subr.mxu0 0.0
    %484 = vmatpush1.msra.mxu0 %v174
    %485 = vmatprep.subr.mxu0 0.0
    %486 = vmatpush1.msra.mxu0 %v175
    %487 = vmatprep.subr.mxu0 0.0
    %488 = vmatpush1.msra.mxu0 %v176
    %489 = vmatprep.subr.mxu0 0.0
    %490 = vmatpush1.msra.mxu0 %v177
    %491 = vmatprep.subr.mxu0 0.0
    %492 = vmatpush1.msra.mxu0 %v178
    %493 = vmatprep.subr.mxu0 0.0
    %494 = vmatpush1.msra.mxu0 %v179
    %495 = vmatprep.subr.mxu0 0.0
    %496 = vmatpush1.msra.mxu0 %v180
    %497 = vmatprep.subr.mxu0 0.0
    %498 = vmatpush1.msra.mxu0 %v181
    %499 = vmatprep.subr.mxu0 0.0
    %500 = vmatpush1.msra.mxu0 %v182
    %501 = vmatprep.subr.mxu0 0.0
    %502 = vmatpush1.msra.mxu0 %v183
    %503 = vmatprep.subr.mxu0 0.0
    %504 = vmatpush1.msra.mxu0 %v184
    %505 = vmatprep.subr.mxu0 0.0
    %506 = vmatpush1.msra.mxu0 %v185
    %507 = vmatprep.subr.mxu0 0.0
    %508 = vmatpush1.msra.mxu0 %v186
    %509 = vmatprep.subr.mxu0 0.0
    %510 = vmatpush1.msra.mxu0 %v187
    %511 = vmatprep.subr.mxu0 0.0
    %512 = vmatpush1.msra.mxu0 %v188
    %513 = vmatprep.subr.mxu0 0.0
    %514 = vmatpush1.msra.mxu0 %v189
    %515 = vmatprep.mubr.f32.mxu0 %v232
    %516 = vmatmul.mubr.f32.gmra.mrb[0].mxu0 %v230
    %v517 = vpop.f32.mrb[0].mxu0
    %v518 = vadd.f32 %v448, %v517
    %v519 = vpop.f32.mrb[0].mxu0
    %520 = vdwg.mxu0
    %v521 = vmax.f32 %v518, 0.0
    %v522 = vld [vmem:[#allocation7] sm:$0xff]
    %v523 = vld [vmem:[#allocation7 + $0x8] sm:$0xff]
    %v524 = vld [vmem:[#allocation7 + $0x10] sm:$0xff]
    %v525 = vld [vmem:[#allocation7 + $0x18] sm:$0xff]
    %v526 = vld [vmem:[#allocation7 + $0x20] sm:$0xff]
    %v527 = vld [vmem:[#allocation7 + $0x28] sm:$0xff]
    %v528 = vld [vmem:[#allocation7 + $0x30] sm:$0xff]
    %v529 = vld [vmem:[#allocation7 + $0x38] sm:$0xff]
    %v530 = vld [vmem:[#allocation7 + $0x40] sm:$0xff]
    %v531 = vld [vmem:[#allocation7 + $0x48] sm:$0xff]
    %v532 = vld [vmem:[#allocation7 + $0x50] sm:$0xff]
    %v533 = vld [vmem:[#allocation7 + $0x58] sm:$0xff]
    %v534 = vld [vmem:[#allocation7 + $0x60] sm:$0xff]
    %v535 = vld [vmem:[#allocation7 + $0x68] sm:$0xff]
    %v536 = vld [vmem:[#allocation7 + $0x70] sm:$0xff]
    %v537 = vld [vmem:[#allocation7 + $0x78] sm:$0xff]
    %v538 = vld [vmem:[%s4] sm:$0x1]
    %v540 = vlaneseq
    %v541 = vshrl.u32 %v540, 7
    %v542 = vsub.s32 0, %v541
    %v543 = vrot.slane %v538, %v542
    %545 = vmatprep.subr.mxu0 0.0
    %546 = vmatpush1.msra.mxu0 %v522
    %547 = vmatprep.subr.mxu0 0.0
    %548 = vmatpush1.msra.mxu0 %v523
    %549 = vmatprep.subr.mxu0 0.0
    %550 = vmatpush1.msra.mxu0 %v524
    %551 = vmatprep.subr.mxu0 0.0
    %552 = vmatpush1.msra.mxu0 %v525
    %553 = vmatprep.subr.mxu0 0.0
    %554 = vmatpush1.msra.mxu0 %v526
    %555 = vmatprep.subr.mxu0 0.0
    %556 = vmatpush1.msra.mxu0 %v527
    %557 = vmatprep.subr.mxu0 0.0
    %558 = vmatpush1.msra.mxu0 %v528
    %559 = vmatprep.subr.mxu0 0.0
    %560 = vmatpush1.msra.mxu0 %v529
    %561 = vmatprep.subr.mxu0 0.0
    %562 = vmatpush1.msra.mxu0 %v530
    %563 = vmatprep.subr.mxu0 0.0
    %564 = vmatpush1.msra.mxu0 %v531
    %565 = vmatprep.subr.mxu0 0.0
    %566 = vmatpush1.msra.mxu0 %v532
    %567 = vmatprep.subr.mxu0 0.0
    %568 = vmatpush1.msra.mxu0 %v533
    %569 = vmatprep.subr.mxu0 0.0
    %570 = vmatpush1.msra.mxu0 %v534
    %571 = vmatprep.subr.mxu0 0.0
    %572 = vmatpush1.msra.mxu0 %v535
    %573 = vmatprep.subr.mxu0 0.0
    %574 = vmatpush1.msra.mxu0 %v536
    %575 = vmatprep.subr.mxu0 0.0
    %576 = vmatpush1.msra.mxu0 %v537
    %577 = vmatprep.subr.mxu0 0.0
    %578 = vmatpush1.msra.mxu0 0.0
    %579 = vmatprep.subr.mxu0 0.0
    %580 = vmatpush1.msra.mxu0 0.0
    %581 = vmatprep.subr.mxu0 0.0
    %582 = vmatpush1.msra.mxu0 0.0
    %583 = vmatprep.subr.mxu0 0.0
    %584 = vmatpush1.msra.mxu0 0.0
    %585 = vmatprep.subr.mxu0 0.0
    %586 = vmatpush1.msra.mxu0 0.0
    %587 = vmatprep.subr.mxu0 0.0
    %588 = vmatpush1.msra.mxu0 0.0
    %589 = vmatprep.subr.mxu0 0.0
    %590 = vmatpush1.msra.mxu0 0.0
    %591 = vmatprep.subr.mxu0 0.0
    %592 = vmatpush1.msra.mxu0 0.0
    %593 = vmatprep.subr.mxu0 0.0
    %594 = vmatpush1.msra.mxu0 0.0
    %595 = vmatprep.subr.mxu0 0.0
    %596 = vmatpush1.msra.mxu0 0.0
    %597 = vmatprep.subr.mxu0 0.0
    %598 = vmatpush1.msra.mxu0 0.0
    %599 = vmatprep.subr.mxu0 0.0
    %600 = vmatpush1.msra.mxu0 0.0
    %601 = vmatprep.subr.mxu0 0.0
    %602 = vmatpush1.msra.mxu0 0.0
    %603 = vmatprep.subr.mxu0 0.0
    %604 = vmatpush1.msra.mxu0 0.0
    %605 = vmatprep.subr.mxu0 0.0
    %606 = vmatpush1.msra.mxu0 0.0
    %607 = vmatprep.subr.mxu0 0.0
    %608 = vmatpush1.msra.mxu0 0.0
    %609 = vmatprep.mubr.f32.mxu0 0.0
    %610 = vmatmul.mubr.f32.gmra.mrb[0].mxu0 %v521
    %v611 = vpop.f32.mrb[0].mxu0
    %v612 = vadd.f32 %v543, %v611
    %v613 = vpop.f32.mrb[0].mxu0
    %614 = vdwg.mxu0
    %615 = vst [vmem:[#allocation8] sm:$0x3] %v612
    // Predicated region
    $region34: #{tpu_custom_call.1} parent=1 // pred_check
      _
    $region35: #{tpu_custom_call.1} parent=1 // pred_check_branch
      %617 = sbr.rel (0) target = $region37
    $region36: #{tpu_custom_call.1} parent=1 // pred_region
      %s619 = ssub.s32 32, 32
      %620 = vsyncadd [#allocation4], %s619
      %s622 = sshll.u32 [#allocation8], 4
      %s623 = int_to_ptr.vmem [resolvable:$true] %s622
      %625 = dma.vmem_to_hbm [thread:$0]  %s623, 32, %s5, [#allocation4]
    $region37: #{tpu_custom_call.1} parent=1 // pred_fallthru
      _
    // Predicated region
    $region38: #{tpu_custom_call.1} parent=1 // pred_check
      _
    $region39: #{tpu_custom_call.1} parent=1 // pred_check_branch
      %627 = sbr.rel (0) target = $region41
    $region40: #{tpu_custom_call.1} parent=1 // pred_region
      %628 = dma.done [#allocation4], 32
    $region41: #{tpu_custom_call.1} parent=1 // pred_fallthru
      _
    %629 = vsyncpa [#allocation3], 1
    %630 = vsyncpa [#allocation6], 1
    %631 = vsyncpa [#allocation4], 1

</llo_original>
